<compile_context>
chip_gen: v5e
topology: v5e:2x2
jax: 0.10.0
libtpu: 0.0.40
codegen_flags: <defaults>
</compile_context>

<pallas_src>
import jax
import jax.numpy as jnp
from jax import lax
from jax.experimental import pallas as pl
from jax.experimental.pallas import tpu as pltpu


def _round_up(x: int, m: int) -> int:
    return ((x + m - 1) // m) * m


def _three_net_kernel(x_ref, w1_ref, b1_ref, w2_ref, b2_ref, w3_ref, b3_ref, o_ref):
    # x_ref : [TB, in_num]   natural batch-major tile (one contiguous DMA)
    # wN_ref: [outN, inN]    PyTorch nn.Linear layout (VMEM-resident)
    # bN_ref: [outN, 1]      broadcast across the lane (batch) axis
    # o_ref : [out_num, TB]  lane-dense output slab
    x = x_ref[...]

    # Layer 1: contract the feature dim of BOTH operands ("NT" pattern, same
    # dimension_numbers as q @ k^T in the TPU flash-attention kernel).  Result
    # is feature-major [10, TB]: batch sits on lanes, MXU N = TB.
    h = lax.dot_general(w1_ref[...], x, (((1,), (1,)), ((), ())),
                        preferred_element_type=jnp.float32)
    h = jnp.maximum(h + b1_ref[...], 0.0)                      # f32 bias+ReLU (v5e-safe)

    # Layers 2/3: plain feature-major matmuls W[out,in] @ h[in, TB].
    h = jnp.dot(w2_ref[...], h.astype(w2_ref.dtype),
                preferred_element_type=jnp.float32)
    h = jnp.maximum(h + b2_ref[...], 0.0)

    h = jnp.dot(w3_ref[...], h.astype(w3_ref.dtype),
                preferred_element_type=jnp.float32)
    o_ref[...] = (h + b3_ref[...]).astype(o_ref.dtype)          # lane-dense store


def three_net_forward(x, params, *, tile_cap=8192, use_bf16=False):
    """x: [B, in_num] float32.  params: PyTorch-layout w1,b1,w2,b2,w3,b3."""
    w1, b1 = params["w1"], params["b1"]
    w2, b2 = params["w2"], params["b2"]
    w3, b3 = params["w3"], params["b3"]

    B, in_num = x.shape
    out_num = w3.shape[0]

    # ---- tile selection --------------------------------------------------
    # tile_b is a multiple of 128 (lane width of the lane-dense output block).
    # Prefer >= 2 tiles whenever the batch allows so v7x's two TensorCores
    # both get work; cap the tile so VMEM (batch-major x block is lane-padded
    # in VMEM) stays well inside the scoped limit on every generation.
    b128 = _round_up(max(B, 1), 128)
    n_tiles = -(-b128 // tile_cap)          # ceil div
    if b128 >= 256:
        n_tiles = max(n_tiles, 2)
    tile_b = _round_up(-(-b128 // n_tiles), 128)
    b_pad = n_tiles * tile_b

    # ---- operand prep (no transpose, at most one fused pad+cast pass) -----
    mm_dtype = jnp.bfloat16 if use_bf16 else x.dtype
    xp = x.astype(mm_dtype)
    if b_pad != B:
        xp = jnp.pad(xp, ((0, b_pad - B), (0, 0)))   # zero rows, sliced off below
    w1m, w2m, w3m = (w.astype(mm_dtype) for w in (w1, w2, w3))

    def resident(arr):
        # Constant index_map -> fetched once, stays VMEM-resident across grid.
        return pl.BlockSpec(arr.shape, lambda i: (0, 0))

    yt = pl.pallas_call(
        _three_net_kernel,
        out_shape=jax.ShapeDtypeStruct((out_num, b_pad), jnp.float32),
        grid=(n_tiles,),
        in_specs=[
            pl.BlockSpec((tile_b, in_num), lambda i: (i, 0)),   # contiguous batch tile
            resident(w1m), resident(b1),
            resident(w2m), resident(b2),
            resident(w3m), resident(b3),
        ],
        out_specs=pl.BlockSpec((out_num, tile_b), lambda i: (0, i)),
        compiler_params=pltpu.CompilerParams(
            dimension_semantics=("parallel",),       # v7x: shard batch over 2 TCs
            vmem_limit_bytes=32 * 1024 * 1024,       # explicit; v5e default is 16 MiB
        ),
    )(xp, w1m, b1, w2m, b2, w3m, b3)

    return yt[:, :B].T                                           # [B, out_num]


def init_params(key, in_num=13, out_num=1):
    """nn.Linear-style U(-1/sqrt(fan_in), 1/sqrt(fan_in)) init.

    Weights in PyTorch layout [out_features, in_features]; biases [out_features, 1].
    """
    dims = [(in_num, 10), (10, 6), (6, out_num)]
    params = {}
    keys = jax.random.split(key, 2 * len(dims))
    for i, (fan_in, fan_out) in enumerate(dims):
        bound = 1.0 / jnp.sqrt(jnp.float32(fan_in))
        params[f"w{i + 1}"] = jax.random.uniform(
            keys[2 * i], (fan_out, fan_in), minval=-bound, maxval=bound, dtype=jnp.float32)
        params[f"b{i + 1}"] = jax.random.uniform(
            keys[2 * i + 1], (fan_out, 1), minval=-bound, maxval=bound, dtype=jnp.float32)
    return params


def reference_forward(x, params):
    hp = lax.Precision.HIGHEST
    h1 = jnp.maximum(jnp.dot(x, params["w1"].T, precision=hp) + params["b1"].T, 0.0)
    h2 = jnp.maximum(jnp.dot(h1, params["w2"].T, precision=hp) + params["b2"].T, 0.0)
    return jnp.dot(h2, params["w3"].T, precision=hp) + params["b3"].T


if __name__ == "__main__":
    in_num, out_num = 13, 1

    key = jax.random.PRNGKey(0)
    k_p, k_x1, k_x2 = jax.random.split(key, 3)
    params = init_params(k_p, in_num=in_num, out_num=out_num)

    # Small batch (module's natural usage): single 128-row tile.
    batch1 = 8
    x1 = jax.random.normal(k_x1, (batch1, in_num), dtype=jnp.float32)
    y1 = jax.block_until_ready(three_net_forward(x1, params))
    y1_ref = reference_forward(x1, params)
    assert y1.shape == (batch1, out_num)
    assert jnp.allclose(y1, y1_ref, atol=1e-3, rtol=1e-3), "mismatch vs reference (B=8)"

    # Non-multiple batch: exercises padding and a 2-tile grid (both v7x TCs fed).
    batch2 = 1031
    x2 = jax.random.normal(k_x2, (batch2, in_num), dtype=jnp.float32)
    y2 = jax.block_until_ready(three_net_forward(x2, params))
    y2_ref = reference_forward(x2, params)
    assert y2.shape == (batch2, out_num)
    assert jnp.allclose(y2, y2_ref, atol=1e-3, rtol=1e-3), "mismatch vs reference (B=1031)"

    # bf16 HBM/MXU path (halves dominant x bytes; f32 bias+ReLU kept in-kernel).
    y3 = jax.block_until_ready(three_net_forward(x2, params, use_bf16=True))
    assert y3.shape == (batch2, out_num)
    assert jnp.allclose(y3, y2_ref, atol=5e-2, rtol=5e-2), "mismatch vs reference (bf16)"

    print("KERNEL_OK")
</pallas_src>

<mosaic_0001>
module attributes {stable_mosaic.version = 11 : i64} {
  func.func @_three_net_kernel(%arg0: i32, %arg1: memref<128x13xf32, #tpu.memory_space<vmem>>, %arg2: memref<10x13xf32, #tpu.memory_space<vmem>>, %arg3: memref<10x1xf32, #tpu.memory_space<vmem>>, %arg4: memref<6x10xf32, #tpu.memory_space<vmem>>, %arg5: memref<6x1xf32, #tpu.memory_space<vmem>>, %arg6: memref<1x6xf32, #tpu.memory_space<vmem>>, %arg7: memref<1x1xf32, #tpu.memory_space<vmem>>, %arg8: memref<1x128xf32, #tpu.memory_space<vmem>>) attributes {dimension_semantics = [#tpu.dimension_semantics<parallel>], iteration_bounds = array<i64: 1>, scalar_prefetch = 0 : i64, scratch_operands = 0 : i64, tpu.core_type = #tpu.core_type<tc>, window_params = [{transform_indices = @transform_0, window_bounds = array<i64: 128, 13>}, {pipeline_mode = #tpu.pipeline_mode<synchronous>, transform_indices = @transform_1, window_bounds = array<i64: 10, 13>}, {pipeline_mode = #tpu.pipeline_mode<synchronous>, transform_indices = @transform_2, window_bounds = array<i64: 10, 1>}, {pipeline_mode = #tpu.pipeline_mode<synchronous>, transform_indices = @transform_3, window_bounds = array<i64: 6, 10>}, {pipeline_mode = #tpu.pipeline_mode<synchronous>, transform_indices = @transform_4, window_bounds = array<i64: 6, 1>}, {pipeline_mode = #tpu.pipeline_mode<synchronous>, transform_indices = @transform_5, window_bounds = array<i64: 1, 6>}, {pipeline_mode = #tpu.pipeline_mode<synchronous>, transform_indices = @transform_6, window_bounds = array<i64: 1, 1>}, {transform_indices = @transform_7, window_bounds = array<i64: 1, 128>}]} {
    %c0 = arith.constant 0 : index
    %c0_0 = arith.constant 0 : index
    %0 = vector.load %arg1[%c0, %c0_0] : memref<128x13xf32, #tpu.memory_space<vmem>>, vector<128x13xf32>
    %c0_1 = arith.constant 0 : index
    %c0_2 = arith.constant 0 : index
    %1 = vector.load %arg2[%c0_1, %c0_2] : memref<10x13xf32, #tpu.memory_space<vmem>>, vector<10x13xf32>
    %cst = arith.constant dense<0.000000e+00> : vector<10x128xf32>
    %2 = tpu.matmul %1, %0, %cst {dimension_numbers = #tpu.dot_dimension_numbers<[1], [1], [0], [0], [0, 0, 1, 0], [], []>} : vector<10x13xf32>, vector<128x13xf32>, vector<10x128xf32> -> vector<10x128xf32>
    %c0_3 = arith.constant 0 : index
    %c0_4 = arith.constant 0 : index
    %3 = vector.load %arg3[%c0_3, %c0_4] : memref<10x1xf32, #tpu.memory_space<vmem>>, vector<10x1xf32>
    %4 = vector.broadcast %3 : vector<10x1xf32> to vector<10x128xf32>
    %5 = arith.addf %2, %4 : vector<10x128xf32>
    %cst_5 = arith.constant 0.000000e+00 : f32
    %6 = vector.broadcast %cst_5 : f32 to vector<10x128xf32>
    %7 = arith.maximumf %5, %6 : vector<10x128xf32>
    %c0_6 = arith.constant 0 : index
    %c0_7 = arith.constant 0 : index
    %8 = vector.load %arg4[%c0_6, %c0_7] : memref<6x10xf32, #tpu.memory_space<vmem>>, vector<6x10xf32>
    %cst_8 = arith.constant dense<0.000000e+00> : vector<6x128xf32>
    %9 = tpu.matmul %8, %7, %cst_8 {dimension_numbers = #tpu.dot_dimension_numbers<[1], [0], [0], [1], [0, 0, 1, 1], [], []>} : vector<6x10xf32>, vector<10x128xf32>, vector<6x128xf32> -> vector<6x128xf32>
    %c0_9 = arith.constant 0 : index
    %c0_10 = arith.constant 0 : index
    %10 = vector.load %arg5[%c0_9, %c0_10] : memref<6x1xf32, #tpu.memory_space<vmem>>, vector<6x1xf32>
    %11 = vector.broadcast %10 : vector<6x1xf32> to vector<6x128xf32>
    %12 = arith.addf %9, %11 : vector<6x128xf32>
    %cst_11 = arith.constant 0.000000e+00 : f32
    %13 = vector.broadcast %cst_11 : f32 to vector<6x128xf32>
    %14 = arith.maximumf %12, %13 : vector<6x128xf32>
    %c0_12 = arith.constant 0 : index
    %c0_13 = arith.constant 0 : index
    %15 = vector.load %arg6[%c0_12, %c0_13] : memref<1x6xf32, #tpu.memory_space<vmem>>, vector<1x6xf32>
    %cst_14 = arith.constant dense<0.000000e+00> : vector<1x128xf32>
    %16 = tpu.matmul %15, %14, %cst_14 {dimension_numbers = #tpu.dot_dimension_numbers<[1], [0], [0], [1], [0, 0, 1, 1], [], []>} : vector<1x6xf32>, vector<6x128xf32>, vector<1x128xf32> -> vector<1x128xf32>
    %c0_15 = arith.constant 0 : index
    %c0_16 = arith.constant 0 : index
    %17 = vector.load %arg7[%c0_15, %c0_16] : memref<1x1xf32, #tpu.memory_space<vmem>>, vector<1x1xf32>
    %18 = vector.broadcast %17 : vector<1x1xf32> to vector<1x128xf32>
    %19 = arith.addf %16, %18 : vector<1x128xf32>
    %c0_17 = arith.constant 0 : index
    %c0_18 = arith.constant 0 : index
    %20 = vector.load %arg8[%c0_17, %c0_18] : memref<1x128xf32, #tpu.memory_space<vmem>>, vector<1x128xf32>
    tpu.vector_store %arg8[%c0_17, %c0_18], %19 {strides = array<i32>} : memref<1x128xf32, #tpu.memory_space<vmem>>, vector<1x128xf32>,
    return
  }
  func.func @transform_0(%arg0: i32) -> (i32, i32) {
    %c0_i32 = arith.constant 0 : i32
    %c0_i32_0 = arith.constant 0 : i32
    return %arg0, %c0_i32 : i32, i32
  }
  func.func @transform_1(%arg0: i32) -> (i32, i32) {
    %c0_i32 = arith.constant 0 : i32
    %c0_i32_0 = arith.constant 0 : i32
    %c0_i32_1 = arith.constant 0 : i32
    return %c0_i32, %c0_i32_0 : i32, i32
  }
  func.func @transform_2(%arg0: i32) -> (i32, i32) {
    %c0_i32 = arith.constant 0 : i32
    %c0_i32_0 = arith.constant 0 : i32
    %c0_i32_1 = arith.constant 0 : i32
    return %c0_i32, %c0_i32_0 : i32, i32
  }
  func.func @transform_3(%arg0: i32) -> (i32, i32) {
    %c0_i32 = arith.constant 0 : i32
    %c0_i32_0 = arith.constant 0 : i32
    %c0_i32_1 = arith.constant 0 : i32
    return %c0_i32, %c0_i32_0 : i32, i32
  }
  func.func @transform_4(%arg0: i32) -> (i32, i32) {
    %c0_i32 = arith.constant 0 : i32
    %c0_i32_0 = arith.constant 0 : i32
    %c0_i32_1 = arith.constant 0 : i32
    return %c0_i32, %c0_i32_0 : i32, i32
  }
  func.func @transform_5(%arg0: i32) -> (i32, i32) {
    %c0_i32 = arith.constant 0 : i32
    %c0_i32_0 = arith.constant 0 : i32
    %c0_i32_1 = arith.constant 0 : i32
    return %c0_i32, %c0_i32_0 : i32, i32
  }
  func.func @transform_6(%arg0: i32) -> (i32, i32) {
    %c0_i32 = arith.constant 0 : i32
    %c0_i32_0 = arith.constant 0 : i32
    %c0_i32_1 = arith.constant 0 : i32
    return %c0_i32, %c0_i32_0 : i32, i32
  }
  func.func @transform_7(%arg0: i32) -> (i32, i32) {
    %c0_i32 = arith.constant 0 : i32
    %c0_i32_0 = arith.constant 0 : i32
    return %c0_i32, %arg0 : i32, i32
  }
}

</mosaic_0001>

<llo_original>
// kernel: tpu_custom_call.1
$region0: #{tpu_custom_call.1}
  #allocation0 [shape = 'u32[]', space=smem, size = 0x4, offset = 0x4, fixed_abs, tag = 'smem constant byte address 0x4 - core index']
  #allocation1 [shape = 'u32[72,128]{1,0:T(1,128)}', space=vmem, size = 0x9000, scoped, tag = 'internal scratch']
  #allocation2 [shape = 'f32[1,1]{1,0:T(1,128)S(1)}', space=vmem, size = 0x200, scoped, tag = 'scoped memory for tpu_custom_call.1']
  %s0 = inlined_call_operand.vmem [shape: f32[128,13], index: 0, kind: input, shape index: {}]
  %s1 = inlined_call_operand.vmem [shape: f32[10,13], index: 1, kind: input, shape index: {}]
  %s2 = inlined_call_operand.vmem [shape: f32[10,1], index: 2, kind: input, shape index: {}]
  %s3 = inlined_call_operand.vmem [shape: f32[6,10], index: 3, kind: input, shape index: {}]
  %s4 = inlined_call_operand.vmem [shape: f32[6,1], index: 4, kind: input, shape index: {}]
  %s5 = inlined_call_operand.vmem [shape: f32[1,6], index: 5, kind: input, shape index: {}]
  %s6 = inlined_call_operand.<no memory space> [shape: f32[1,1], index: 6, kind: input, shape index: {}]
  %s7 = inlined_call_operand.hbm [shape: f32[1,128], index: 7, kind: output, shape index: {}]
  %s8 = sld [smem:[#allocation0]]
  $region38: #{tpu_custom_call.1} parent=0
    _
  %s10 = ssub.s32 1, %s8
  %s11 = scalar_select 0, %s10, %s8
  %v12 = vstv %s6
  %13 = vst [vmem:[#allocation2] sm:$0x1] %v12
  $region1: #{tpu_custom_call.1} parent=0
    #allocation3 [shape = 'u8[512]{0}', space=vmem, size = 0x400, scoped, tag = 'output window, operand 0, single buffered']
    #allocation4 [shape = 's32[1]{0}', space=sflag, size = 0x4, scoped, tag = 'scoped memory for tpu_custom_call.1']
    %14 = vsyncpa [#allocation4], 0
    // Predicated region
    $region2: #{tpu_custom_call.1} parent=1 // pred_check
      _
    $region3: #{tpu_custom_call.1} parent=1 // pred_check_branch
      %16 = sbr.rel (0) target = $region5
    $region4: #{tpu_custom_call.1} parent=1 // pred_region
      _
    $region5: #{tpu_custom_call.1} parent=1 // pred_fallthru
      _
    // Predicated region
    $region6: #{tpu_custom_call.1} parent=1 // pred_check
      _
    $region7: #{tpu_custom_call.1} parent=1 // pred_check_branch
      %18 = sbr.rel (0) target = $region9
    $region8: #{tpu_custom_call.1} parent=1 // pred_region
      _
    $region9: #{tpu_custom_call.1} parent=1 // pred_fallthru
      _
    // Predicated region
    $region10: #{tpu_custom_call.1} parent=1 // pred_check
      _
    $region11: #{tpu_custom_call.1} parent=1 // pred_check_branch
      %20 = sbr.rel (0) target = $region13
    $region12: #{tpu_custom_call.1} parent=1 // pred_region
      _
    $region13: #{tpu_custom_call.1} parent=1 // pred_fallthru
      _
    // Predicated region
    $region14: #{tpu_custom_call.1} parent=1 // pred_check
      _
    $region15: #{tpu_custom_call.1} parent=1 // pred_check_branch
      %22 = sbr.rel (0) target = $region17
    $region16: #{tpu_custom_call.1} parent=1 // pred_region
      _
    $region17: #{tpu_custom_call.1} parent=1 // pred_fallthru
      _
    // Predicated region
    $region18: #{tpu_custom_call.1} parent=1 // pred_check
      _
    $region19: #{tpu_custom_call.1} parent=1 // pred_check_branch
      %24 = sbr.rel (0) target = $region21
    $region20: #{tpu_custom_call.1} parent=1 // pred_region
      _
    $region21: #{tpu_custom_call.1} parent=1 // pred_fallthru
      _
    // Predicated region
    $region22: #{tpu_custom_call.1} parent=1 // pred_check
      _
    $region23: #{tpu_custom_call.1} parent=1 // pred_check_branch
      %26 = sbr.rel (0) target = $region25
    $region24: #{tpu_custom_call.1} parent=1 // pred_region
      _
    $region25: #{tpu_custom_call.1} parent=1 // pred_fallthru
      _
    // Predicated region
    $region26: #{tpu_custom_call.1} parent=1 // pred_check
      _
    $region27: #{tpu_custom_call.1} parent=1 // pred_check_branch
      %28 = sbr.rel (0) target = $region29
    $region28: #{tpu_custom_call.1} parent=1 // pred_region
      _
    $region29: #{tpu_custom_call.1} parent=1 // pred_fallthru
      _
    %v29 = vld [vmem:[%s0] sm:$0xff]
    %v30 = vld [vmem:[%s0 + $0x8] sm:$0xff]
    %v31 = vld [vmem:[%s0 + $0x10] sm:$0xff]
    %v32 = vld [vmem:[%s0 + $0x18] sm:$0xff]
    %v33 = vld [vmem:[%s0 + $0x20] sm:$0xff]
    %v34 = vld [vmem:[%s0 + $0x28] sm:$0xff]
    %v35 = vld [vmem:[%s0 + $0x30] sm:$0xff]
    %v36 = vld [vmem:[%s0 + $0x38] sm:$0xff]
    %v37 = vld [vmem:[%s0 + $0x40] sm:$0xff]
    %v38 = vld [vmem:[%s0 + $0x48] sm:$0xff]
    %v39 = vld [vmem:[%s0 + $0x50] sm:$0xff]
    %v40 = vld [vmem:[%s0 + $0x58] sm:$0xff]
    %v41 = vld [vmem:[%s0 + $0x60] sm:$0xff]
    %v42 = vld [vmem:[%s0 + $0x68] sm:$0xff]
    %v43 = vld [vmem:[%s0 + $0x70] sm:$0xff]
    %v44 = vld [vmem:[%s0 + $0x78] sm:$0xff]
    %v45 = vld [vmem:[%s1] sm:$0xff]
    %v46 = vld [vmem:[%s1 + $0x8] sm:$0x3]
    %v47 = vld [vmem:[%s2] sm:$0xff]
    %v48 = vld [vmem:[%s2 + $0x8] sm:$0x3]
    %50 = vset.pattern.permute.xlu0 0
    %51 = vperm.xlu0 %50, %v47
    %v52 = vpop.permute.xlu0 %51
    %55 = vset.pattern.permute.xlu0 0
    %56 = vperm.xlu0 %55, %v48
    %v57 = vpop.permute.xlu0 %56
    %vm59 = vcmask 105472
    %v61 = vsel %vm59, %v45, 0
    %v64 = vsel %vm59, %v46, 0
    %v67 = vsel %vm59, %v29, 0
    %v70 = vsel %vm59, %v30, 0
    %v73 = vsel %vm59, %v31, 0
    %v76 = vsel %vm59, %v32, 0
    %v79 = vsel %vm59, %v33, 0
    %v82 = vsel %vm59, %v34, 0
    %v85 = vsel %vm59, %v35, 0
    %v88 = vsel %vm59, %v36, 0
    %v91 = vsel %vm59, %v37, 0
    %v94 = vsel %vm59, %v38, 0
    %v97 = vsel %vm59, %v39, 0
    %v100 = vsel %vm59, %v40, 0
    %v103 = vsel %vm59, %v41, 0
    %v106 = vsel %vm59, %v42, 0
    %v109 = vsel %vm59, %v43, 0
    %v112 = vsel %vm59, %v44, 0
    %114 = vmatpush.xpose.msra.mxu0 %v112
    %115 = vmatpush.xpose.msra.mxu0 %v109
    %116 = vmatpush.xpose.msra.mxu0 %v106
    %117 = vmatpush.xpose.msra.mxu0 %v103
    %118 = vmatpush.xpose.msra.mxu0 %v100
    %119 = vmatpush.xpose.msra.mxu0 %v97
    %120 = vmatpush.xpose.msra.mxu0 %v94
    %121 = vmatpush.xpose.msra.mxu0 %v91
    %122 = vmatpush.xpose.msra.mxu0 %v88
    %123 = vmatpush.xpose.msra.mxu0 %v85
    %124 = vmatpush.xpose.msra.mxu0 %v82
    %125 = vmatpush.xpose.msra.mxu0 %v79
    %126 = vmatpush.xpose.msra.mxu0 %v76
    %127 = vmatpush.xpose.msra.mxu0 %v73
    %128 = vmatpush.xpose.msra.mxu0 %v70
    %129 = vmatpush.xpose.msra.mxu0 %v67
    %130 = vmatmul.f32.gmra.mxu0 %v61
    %v131 = vpop.f32.mrf.mxu0
    %v132 = vadd.f32 %v52, %v131
    %133 = vmatmul.f32.gmra.mxu0 %v64
    %v134 = vpop.f32.mrf.mxu0
    %v135 = vadd.f32 %v57, %v134
    %136 = vdwg.mxu0
    %v137 = vmax.f32 %v132, 0.0
    %v138 = vmax.f32 %v135, 0.0
    %v139 = vld [vmem:[%s3] sm:$0x3f]
    %v140 = vld [vmem:[%s4] sm:$0x3f]
    %142 = vset.pattern.permute.xlu0 0
    %143 = vperm.xlu0 %142, %v140
    %v144 = vpop.permute.xlu0 %143
    %vm146 = vcmask 80896
    %v148 = vsel %vm146, %v139, 0
    %vm150 = vcmask 1041408
    %v152 = vsel %vm150, %v138, 0
    %154 = vmatpush.msra.mxu0 0.0
    %155 = vmatpush.msra.mxu0 0.0
    %156 = vmatpush.msra.mxu0 0.0
    %157 = vmatpush.msra.mxu0 0.0
    %158 = vmatpush.msra.mxu0 0.0
    %159 = vmatpush.msra.mxu0 0.0
    %160 = vmatpush.msra.mxu0 0.0
    %161 = vmatpush.msra.mxu0 0.0
    %162 = vmatpush.msra.mxu0 0.0
    %163 = vmatpush.msra.mxu0 0.0
    %164 = vmatpush.msra.mxu0 0.0
    %165 = vmatpush.msra.mxu0 0.0
    %166 = vmatpush.msra.mxu0 0.0
    %167 = vmatpush.msra.mxu0 0.0
    %168 = vmatpush.msra.mxu0 %v152
    %169 = vmatpush.msra.mxu0 %v137
    %170 = vmatmul.f32.gmra.mxu0 %v148
    %v171 = vpop.f32.mrf.mxu0
    %v172 = vadd.f32 %v144, %v171
    %173 = vdwg.mxu0
    %v174 = vmax.f32 %v172, 0.0
    %v175 = vld [vmem:[%s5] sm:$0x1]
    %v176 = vld [vmem:[#allocation2] sm:$0x1]
    %178 = vset.pattern.permute.xlu0 0
    %179 = vperm.xlu0 %178, %v176
    %v180 = vpop.permute.xlu0 %179
    %v182 = vperm.slane %v180, 0
    %vm183 = vcmask 48128
    %v185 = vsel %vm183, %v175, 0
    %vm187 = vcmask 1045504
    %v189 = vsel %vm187, %v174, 0
    %191 = vmatpush.msra.mxu0 0.0
    %192 = vmatpush.msra.mxu0 0.0
    %193 = vmatpush.msra.mxu0 0.0
    %194 = vmatpush.msra.mxu0 0.0
    %195 = vmatpush.msra.mxu0 0.0
    %196 = vmatpush.msra.mxu0 0.0
    %197 = vmatpush.msra.mxu0 0.0
    %198 = vmatpush.msra.mxu0 0.0
    %199 = vmatpush.msra.mxu0 0.0
    %200 = vmatpush.msra.mxu0 0.0
    %201 = vmatpush.msra.mxu0 0.0
    %202 = vmatpush.msra.mxu0 0.0
    %203 = vmatpush.msra.mxu0 0.0
    %204 = vmatpush.msra.mxu0 0.0
    %205 = vmatpush.msra.mxu0 0.0
    %206 = vmatpush.msra.mxu0 %v189
    %207 = vmatmul.f32.gmra.mxu0 %v185
    %v208 = vpop.f32.mrf.mxu0
    %v209 = vadd.f32 %v182, %v208
    %210 = vdwg.mxu0
    %211 = vst [vmem:[#allocation3] sm:$0x1] %v209
    // Predicated region
    $region30: #{tpu_custom_call.1} parent=1 // pred_check
      _
    $region31: #{tpu_custom_call.1} parent=1 // pred_check_branch
      %213 = sbr.rel (0) target = $region33
    $region32: #{tpu_custom_call.1} parent=1 // pred_region
      %215 = vsyncadd [#allocation4], 0
      %s217 = sshll.u32 [#allocation3], 4
      %s218 = int_to_ptr.vmem [resolvable:$true] %s217
      %s219 = sshll.u32 %s7, 4
      %s220 = int_to_ptr.hbm [resolvable:$true] %s219
      %222 = dma.vmem_to_hbm [thread:$0]  %s218, 16, %s220, [#allocation4]
    $region33: #{tpu_custom_call.1} parent=1 // pred_fallthru
      _
    // Predicated region
    $region34: #{tpu_custom_call.1} parent=1 // pred_check
      _
    $region35: #{tpu_custom_call.1} parent=1 // pred_check_branch
      %224 = sbr.rel (0) target = $region37
    $region36: #{tpu_custom_call.1} parent=1 // pred_region
      %226 = dma.done [#allocation4], 16
    $region37: #{tpu_custom_call.1} parent=1 // pred_fallthru
      _
    %227 = vsyncpa [#allocation4], 1

</llo_original>
